<compile_context>
chip_gen: v5e
topology: v5e:2x2
jax: 0.10.0
libtpu: 0.0.40
codegen_flags: <defaults>
</compile_context>

<pallas_src>
import numpy as np
import jax
import jax.numpy as jnp
from jax import lax
from jax.experimental import pallas as pl
from jax.experimental.pallas import tpu as pltpu

EMBED_DIM = 64
N_HEADS = 4
HEAD_DIM = EMBED_DIM // N_HEADS
NEG_LARGE = -1e30  # finite stand-in for -inf (exp underflows to exactly 0)


# ----------------------------- Pallas kernel ------------------------------- #

def _attn_kernel(x_ref, mk_ref, mq_ref, win_ref, bin_ref, wout_ref, bout_ref,
                 o_ref):
    x = x_ref[0]                     # (N, E)   activations for this batch item
    mask_k = mk_ref[0]               # (1, N)   key mask (1 = valid)
    mask_q = mq_ref[0]               # (N, 1)   query mask (1 = valid)

    # Fused QKV projection: a single fat MXU matmul (N, E) @ (E, 3E).
    qkv = jnp.dot(x, win_ref[...], preferred_element_type=jnp.float32) \
        + bin_ref[...]               # (N, 3E)

    scale = 1.0 / float(np.sqrt(HEAD_DIM))
    key_bias = (1.0 - mask_k) * NEG_LARGE        # (1, N), VPU only

    ctx_parts = []
    for h in range(N_HEADS):                     # static unroll, H = 4
        lo = h * HEAD_DIM
        q_h = qkv[:, lo:lo + HEAD_DIM] * scale                     # (N, Dh)
        k_h = qkv[:, EMBED_DIM + lo:EMBED_DIM + lo + HEAD_DIM]     # (N, Dh)
        v_h = qkv[:, 2 * EMBED_DIM + lo:2 * EMBED_DIM + lo + HEAD_DIM]

        # scores[i, j] = <q_i, k_j>  (contract dim 1 with dim 1, no transpose)
        s = lax.dot_general(q_h, k_h, (((1,), (1,)), ((), ())),
                            preferred_element_type=jnp.float32)    # (N, N)
        s = s + key_bias                         # mask padded keys (VPU add)
        s = s - jnp.max(s, axis=-1, keepdims=True)
        p = jnp.exp(s)
        p = p / jnp.sum(p, axis=-1, keepdims=True)
        ctx_parts.append(jnp.dot(p, v_h,
                                 preferred_element_type=jnp.float32))  # (N, Dh)

    ctx = jnp.concatenate(ctx_parts, axis=-1)    # (N, E)

    out = jnp.dot(ctx, wout_ref[...], preferred_element_type=jnp.float32) \
        + bout_ref[...]                          # (N, E)
    # fused final masking of padded query positions
    o_ref[0] = out * mask_q


# ------------------------------ host wrapper -------------------------------- #

def attention_aggregator(elem_features, elem_mask, params):
    """elem_features: (B, N, E) float; elem_mask: (B, N) bool/float -> (B, N, E)."""
    B, N, E = elem_features.shape
    assert E == EMBED_DIM

    x = elem_features.astype(jnp.float32)
    mask_f = elem_mask.astype(jnp.float32)
    mk = mask_f.reshape(B, 1, N)     # key-mask layout (lane dim = N)
    mq = mask_f.reshape(B, N, 1)     # query-mask layout (sublane dim = N)

    win_t = params["w_in"].T.astype(jnp.float32)      # (E, 3E)
    bin2 = params["b_in"].reshape(1, 3 * E).astype(jnp.float32)
    wout_t = params["w_out"].T.astype(jnp.float32)    # (E, E)
    bout2 = params["b_out"].reshape(1, E).astype(jnp.float32)

    def const_spec(a):
        nd = a.ndim
        return pl.BlockSpec(a.shape, lambda b, _nd=nd: (0,) * _nd)

    grid_spec = pltpu.PrefetchScalarGridSpec(
        num_scalar_prefetch=0,
        grid=(B,),
        in_specs=[
            pl.BlockSpec((1, N, E), lambda b: (b, 0, 0)),   # x
            pl.BlockSpec((1, 1, N), lambda b: (b, 0, 0)),   # key mask
            pl.BlockSpec((1, N, 1), lambda b: (b, 0, 0)),   # query mask
            const_spec(win_t),                              # QKV weight (resident)
            const_spec(bin2),                               # QKV bias
            const_spec(wout_t),                             # out-proj weight
            const_spec(bout2),                              # out-proj bias
        ],
        out_specs=pl.BlockSpec((1, N, E), lambda b: (b, 0, 0)),
    )

    return pl.pallas_call(
        _attn_kernel,
        out_shape=jax.ShapeDtypeStruct((B, N, E), jnp.float32),
        grid_spec=grid_spec,
        compiler_params=pltpu.CompilerParams(
            dimension_semantics=("parallel",)),
    )(x, mk, mq, win_t, bin2, wout_t, bout2)


# --------------------------- parameter construction ------------------------- #

def init_params(key):
    """Synthetic params with the same shapes as nn.MultiheadAttention(64, 4)."""
    k1, k2, k3, k4 = jax.random.split(key, 4)
    E = EMBED_DIM
    w_in = jax.random.normal(k1, (3 * E, E), jnp.float32) / np.sqrt(E)
    b_in = 0.1 * jax.random.normal(k2, (3 * E,), jnp.float32)
    w_out = jax.random.normal(k3, (E, E), jnp.float32) / np.sqrt(E)
    b_out = 0.1 * jax.random.normal(k4, (E,), jnp.float32)
    return {"w_in": w_in, "b_in": b_in, "w_out": w_out, "b_out": b_out}


# ------------------------------ pure-JAX reference -------------------------- #

def reference_forward(x, elem_mask, params):
    """Mirrors torch.nn.MultiheadAttention self-attention + the module's masking."""
    B, N, E = x.shape
    H, Dh = N_HEADS, HEAD_DIM
    hi = jax.lax.Precision.HIGHEST
    mask_f = elem_mask.astype(jnp.float32)

    qkv = jnp.einsum("bne,fe->bnf", x, params["w_in"], precision=hi) + params["b_in"]
    q, k, v = qkv[..., :E], qkv[..., E:2 * E], qkv[..., 2 * E:]
    q = q * (Dh ** -0.5)

    def split_heads(t):
        return t.reshape(B, N, H, Dh).transpose(0, 2, 1, 3)      # (B, H, N, Dh)

    qh, kh, vh = split_heads(q), split_heads(k), split_heads(v)
    scores = jnp.einsum("bhnd,bhmd->bhnm", qh, kh, precision=hi)
    # key_padding_mask = ~elem_mask -> masked keys get -inf before softmax
    scores = jnp.where(mask_f[:, None, None, :] > 0, scores, -jnp.inf)
    weights = jax.nn.softmax(scores, axis=-1)
    ctx = jnp.einsum("bhnm,bhmd->bhnd", weights, vh, precision=hi)
    ctx = ctx.transpose(0, 2, 1, 3).reshape(B, N, E)
    out = jnp.einsum("bne,fe->bnf", ctx, params["w_out"], precision=hi) + params["b_out"]
    return out * mask_f[..., None]


# ----------------------------------- main ----------------------------------- #

if __name__ == "__main__":
    root = jax.random.PRNGKey(0)
    k_param, k_x = jax.random.split(root)
    params = init_params(k_param)

    B, N = 2, 8
    x = jax.random.normal(k_x, (B, N, EMBED_DIM), jnp.float32)
    lengths = jnp.array([5, 3], dtype=jnp.int32)       # every row has >=1 valid key
    pos = jnp.arange(N, dtype=jnp.int32)[None, :]
    elem_mask = pos < lengths[:, None]                 # (B, N) bool

    out = jax.block_until_ready(attention_aggregator(x, elem_mask, params))
    ref = jax.block_until_ready(reference_forward(x, elem_mask, params))

    assert out.shape == (B, N, EMBED_DIM)
    if not np.allclose(np.asarray(out), np.asarray(ref), rtol=2e-2, atol=2e-2):
        err = float(np.max(np.abs(np.asarray(out) - np.asarray(ref))))
        raise AssertionError(f"Pallas kernel mismatch vs reference, max abs err = {err}")
    print("KERNEL_OK")
</pallas_src>

<mosaic_0001>
module attributes {stable_mosaic.version = 11 : i64} {
  func.func @_attn_kernel(%arg0: i32, %arg1: memref<1x8x64xf32, #tpu.memory_space<vmem>>, %arg2: memref<1x1x8xf32, #tpu.memory_space<vmem>>, %arg3: memref<1x8x1xf32, #tpu.memory_space<vmem>>, %arg4: memref<64x192xf32, #tpu.memory_space<vmem>>, %arg5: memref<1x192xf32, #tpu.memory_space<vmem>>, %arg6: memref<64x64xf32, #tpu.memory_space<vmem>>, %arg7: memref<1x64xf32, #tpu.memory_space<vmem>>, %arg8: memref<1x8x64xf32, #tpu.memory_space<vmem>>) attributes {dimension_semantics = [#tpu.dimension_semantics<parallel>], iteration_bounds = array<i64: 2>, scalar_prefetch = 0 : i64, scratch_operands = 0 : i64, tpu.core_type = #tpu.core_type<tc>, window_params = [{transform_indices = @transform_0, window_bounds = array<i64: 1, 8, 64>}, {transform_indices = @transform_1, window_bounds = array<i64: 1, 1, 8>}, {transform_indices = @transform_2, window_bounds = array<i64: 1, 8, 1>}, {pipeline_mode = #tpu.pipeline_mode<synchronous>, transform_indices = @transform_3, window_bounds = array<i64: 64, 192>}, {pipeline_mode = #tpu.pipeline_mode<synchronous>, transform_indices = @transform_4, window_bounds = array<i64: 1, 192>}, {pipeline_mode = #tpu.pipeline_mode<synchronous>, transform_indices = @transform_5, window_bounds = array<i64: 64, 64>}, {pipeline_mode = #tpu.pipeline_mode<synchronous>, transform_indices = @transform_6, window_bounds = array<i64: 1, 64>}, {transform_indices = @transform_7, window_bounds = array<i64: 1, 8, 64>}]} {
    %c0 = arith.constant 0 : index
    %c0_0 = arith.constant 0 : index
    %c0_1 = arith.constant 0 : index
    %0 = vector.load %arg1[%c0, %c0_0, %c0_1] : memref<1x8x64xf32, #tpu.memory_space<vmem>>, vector<1x8x64xf32>
    %1 = vector.shape_cast %0 : vector<1x8x64xf32> to vector<8x64xf32>
    %c0_2 = arith.constant 0 : index
    %c0_3 = arith.constant 0 : index
    %c0_4 = arith.constant 0 : index
    %2 = vector.load %arg2[%c0_2, %c0_3, %c0_4] : memref<1x1x8xf32, #tpu.memory_space<vmem>>, vector<1x1x8xf32>
    %3 = vector.shape_cast %2 : vector<1x1x8xf32> to vector<1x8xf32>
    %c0_5 = arith.constant 0 : index
    %c0_6 = arith.constant 0 : index
    %c0_7 = arith.constant 0 : index
    %4 = vector.load %arg3[%c0_5, %c0_6, %c0_7] : memref<1x8x1xf32, #tpu.memory_space<vmem>>, vector<1x8x1xf32>
    %5 = vector.shape_cast %4 : vector<1x8x1xf32> to vector<8x1xf32>
    %c0_8 = arith.constant 0 : index
    %c0_9 = arith.constant 0 : index
    %6 = vector.load %arg4[%c0_8, %c0_9] : memref<64x192xf32, #tpu.memory_space<vmem>>, vector<64x192xf32>
    %cst = arith.constant dense<0.000000e+00> : vector<8x192xf32>
    %7 = tpu.matmul %1, %6, %cst {dimension_numbers = #tpu.dot_dimension_numbers<[1], [0], [0], [1], [0, 0, 1, 1], [], []>} : vector<8x64xf32>, vector<64x192xf32>, vector<8x192xf32> -> vector<8x192xf32>
    %c0_10 = arith.constant 0 : index
    %c0_11 = arith.constant 0 : index
    %8 = vector.load %arg5[%c0_10, %c0_11] : memref<1x192xf32, #tpu.memory_space<vmem>>, vector<1x192xf32>
    %9 = vector.broadcast %8 : vector<1x192xf32> to vector<8x192xf32>
    %10 = arith.addf %7, %9 : vector<8x192xf32>
    %cst_12 = arith.constant 1.000000e+00 : f32
    %11 = vector.broadcast %cst_12 : f32 to vector<1x8xf32>
    %12 = arith.subf %11, %3 : vector<1x8xf32>
    %cst_13 = arith.constant -1.000000e+30 : f32
    %13 = vector.broadcast %cst_13 : f32 to vector<1x8xf32>
    %14 = arith.mulf %12, %13 : vector<1x8xf32>
    %15 = vector.extract_strided_slice %10 {offsets = [0, 0], sizes = [8, 16], strides = [1, 1]} : vector<8x192xf32> to vector<8x16xf32>
    %cst_14 = arith.constant 2.500000e-01 : f32
    %16 = vector.broadcast %cst_14 : f32 to vector<8x16xf32>
    %17 = arith.mulf %15, %16 : vector<8x16xf32>
    %18 = vector.extract_strided_slice %10 {offsets = [0, 64], sizes = [8, 16], strides = [1, 1]} : vector<8x192xf32> to vector<8x16xf32>
    %19 = vector.extract_strided_slice %10 {offsets = [0, 128], sizes = [8, 16], strides = [1, 1]} : vector<8x192xf32> to vector<8x16xf32>
    %cst_15 = arith.constant dense<0.000000e+00> : vector<8x8xf32>
    %20 = tpu.matmul %17, %18, %cst_15 {dimension_numbers = #tpu.dot_dimension_numbers<[1], [1], [0], [0], [0, 0, 1, 0], [], []>} : vector<8x16xf32>, vector<8x16xf32>, vector<8x8xf32> -> vector<8x8xf32>
    %21 = vector.broadcast %14 : vector<1x8xf32> to vector<8x8xf32>
    %22 = arith.addf %20, %21 : vector<8x8xf32>
    %cst_16 = arith.constant dense<0xFF800000> : vector<8xf32>
    %23 = vector.multi_reduction <maximumf>, %22, %cst_16 [1] : vector<8x8xf32> to vector<8xf32>
    %24 = vector.shape_cast %23 : vector<8xf32> to vector<8x1xf32>
    %25 = vector.broadcast %24 : vector<8x1xf32> to vector<8x8xf32>
    %26 = arith.subf %22, %25 : vector<8x8xf32>
    %27 = math.exp %26 : vector<8x8xf32>
    %cst_17 = arith.constant dense<0.000000e+00> : vector<8xf32>
    %28 = vector.multi_reduction <add>, %27, %cst_17 [1] : vector<8x8xf32> to vector<8xf32>
    %29 = vector.shape_cast %28 : vector<8xf32> to vector<8x1xf32>
    %30 = vector.broadcast %29 : vector<8x1xf32> to vector<8x8xf32>
    %31 = arith.divf %27, %30 : vector<8x8xf32>
    %cst_18 = arith.constant dense<0.000000e+00> : vector<8x16xf32>
    %32 = tpu.matmul %31, %19, %cst_18 {dimension_numbers = #tpu.dot_dimension_numbers<[1], [0], [0], [1], [0, 0, 1, 1], [], []>} : vector<8x8xf32>, vector<8x16xf32>, vector<8x16xf32> -> vector<8x16xf32>
    %33 = vector.extract_strided_slice %10 {offsets = [0, 16], sizes = [8, 16], strides = [1, 1]} : vector<8x192xf32> to vector<8x16xf32>
    %cst_19 = arith.constant 2.500000e-01 : f32
    %34 = vector.broadcast %cst_19 : f32 to vector<8x16xf32>
    %35 = arith.mulf %33, %34 : vector<8x16xf32>
    %36 = vector.extract_strided_slice %10 {offsets = [0, 80], sizes = [8, 16], strides = [1, 1]} : vector<8x192xf32> to vector<8x16xf32>
    %37 = vector.extract_strided_slice %10 {offsets = [0, 144], sizes = [8, 16], strides = [1, 1]} : vector<8x192xf32> to vector<8x16xf32>
    %cst_20 = arith.constant dense<0.000000e+00> : vector<8x8xf32>
    %38 = tpu.matmul %35, %36, %cst_20 {dimension_numbers = #tpu.dot_dimension_numbers<[1], [1], [0], [0], [0, 0, 1, 0], [], []>} : vector<8x16xf32>, vector<8x16xf32>, vector<8x8xf32> -> vector<8x8xf32>
    %39 = vector.broadcast %14 : vector<1x8xf32> to vector<8x8xf32>
    %40 = arith.addf %38, %39 : vector<8x8xf32>
    %cst_21 = arith.constant dense<0xFF800000> : vector<8xf32>
    %41 = vector.multi_reduction <maximumf>, %40, %cst_21 [1] : vector<8x8xf32> to vector<8xf32>
    %42 = vector.shape_cast %41 : vector<8xf32> to vector<8x1xf32>
    %43 = vector.broadcast %42 : vector<8x1xf32> to vector<8x8xf32>
    %44 = arith.subf %40, %43 : vector<8x8xf32>
    %45 = math.exp %44 : vector<8x8xf32>
    %cst_22 = arith.constant dense<0.000000e+00> : vector<8xf32>
    %46 = vector.multi_reduction <add>, %45, %cst_22 [1] : vector<8x8xf32> to vector<8xf32>
    %47 = vector.shape_cast %46 : vector<8xf32> to vector<8x1xf32>
    %48 = vector.broadcast %47 : vector<8x1xf32> to vector<8x8xf32>
    %49 = arith.divf %45, %48 : vector<8x8xf32>
    %cst_23 = arith.constant dense<0.000000e+00> : vector<8x16xf32>
    %50 = tpu.matmul %49, %37, %cst_23 {dimension_numbers = #tpu.dot_dimension_numbers<[1], [0], [0], [1], [0, 0, 1, 1], [], []>} : vector<8x8xf32>, vector<8x16xf32>, vector<8x16xf32> -> vector<8x16xf32>
    %51 = vector.extract_strided_slice %10 {offsets = [0, 32], sizes = [8, 16], strides = [1, 1]} : vector<8x192xf32> to vector<8x16xf32>
    %cst_24 = arith.constant 2.500000e-01 : f32
    %52 = vector.broadcast %cst_24 : f32 to vector<8x16xf32>
    %53 = arith.mulf %51, %52 : vector<8x16xf32>
    %54 = vector.extract_strided_slice %10 {offsets = [0, 96], sizes = [8, 16], strides = [1, 1]} : vector<8x192xf32> to vector<8x16xf32>
    %55 = vector.extract_strided_slice %10 {offsets = [0, 160], sizes = [8, 16], strides = [1, 1]} : vector<8x192xf32> to vector<8x16xf32>
    %cst_25 = arith.constant dense<0.000000e+00> : vector<8x8xf32>
    %56 = tpu.matmul %53, %54, %cst_25 {dimension_numbers = #tpu.dot_dimension_numbers<[1], [1], [0], [0], [0, 0, 1, 0], [], []>} : vector<8x16xf32>, vector<8x16xf32>, vector<8x8xf32> -> vector<8x8xf32>
    %57 = vector.broadcast %14 : vector<1x8xf32> to vector<8x8xf32>
    %58 = arith.addf %56, %57 : vector<8x8xf32>
    %cst_26 = arith.constant dense<0xFF800000> : vector<8xf32>
    %59 = vector.multi_reduction <maximumf>, %58, %cst_26 [1] : vector<8x8xf32> to vector<8xf32>
    %60 = vector.shape_cast %59 : vector<8xf32> to vector<8x1xf32>
    %61 = vector.broadcast %60 : vector<8x1xf32> to vector<8x8xf32>
    %62 = arith.subf %58, %61 : vector<8x8xf32>
    %63 = math.exp %62 : vector<8x8xf32>
    %cst_27 = arith.constant dense<0.000000e+00> : vector<8xf32>
    %64 = vector.multi_reduction <add>, %63, %cst_27 [1] : vector<8x8xf32> to vector<8xf32>
    %65 = vector.shape_cast %64 : vector<8xf32> to vector<8x1xf32>
    %66 = vector.broadcast %65 : vector<8x1xf32> to vector<8x8xf32>
    %67 = arith.divf %63, %66 : vector<8x8xf32>
    %cst_28 = arith.constant dense<0.000000e+00> : vector<8x16xf32>
    %68 = tpu.matmul %67, %55, %cst_28 {dimension_numbers = #tpu.dot_dimension_numbers<[1], [0], [0], [1], [0, 0, 1, 1], [], []>} : vector<8x8xf32>, vector<8x16xf32>, vector<8x16xf32> -> vector<8x16xf32>
    %69 = vector.extract_strided_slice %10 {offsets = [0, 48], sizes = [8, 16], strides = [1, 1]} : vector<8x192xf32> to vector<8x16xf32>
    %cst_29 = arith.constant 2.500000e-01 : f32
    %70 = vector.broadcast %cst_29 : f32 to vector<8x16xf32>
    %71 = arith.mulf %69, %70 : vector<8x16xf32>
    %72 = vector.extract_strided_slice %10 {offsets = [0, 112], sizes = [8, 16], strides = [1, 1]} : vector<8x192xf32> to vector<8x16xf32>
    %73 = vector.extract_strided_slice %10 {offsets = [0, 176], sizes = [8, 16], strides = [1, 1]} : vector<8x192xf32> to vector<8x16xf32>
    %cst_30 = arith.constant dense<0.000000e+00> : vector<8x8xf32>
    %74 = tpu.matmul %71, %72, %cst_30 {dimension_numbers = #tpu.dot_dimension_numbers<[1], [1], [0], [0], [0, 0, 1, 0], [], []>} : vector<8x16xf32>, vector<8x16xf32>, vector<8x8xf32> -> vector<8x8xf32>
    %75 = vector.broadcast %14 : vector<1x8xf32> to vector<8x8xf32>
    %76 = arith.addf %74, %75 : vector<8x8xf32>
    %cst_31 = arith.constant dense<0xFF800000> : vector<8xf32>
    %77 = vector.multi_reduction <maximumf>, %76, %cst_31 [1] : vector<8x8xf32> to vector<8xf32>
    %78 = vector.shape_cast %77 : vector<8xf32> to vector<8x1xf32>
    %79 = vector.broadcast %78 : vector<8x1xf32> to vector<8x8xf32>
    %80 = arith.subf %76, %79 : vector<8x8xf32>
    %81 = math.exp %80 : vector<8x8xf32>
    %cst_32 = arith.constant dense<0.000000e+00> : vector<8xf32>
    %82 = vector.multi_reduction <add>, %81, %cst_32 [1] : vector<8x8xf32> to vector<8xf32>
    %83 = vector.shape_cast %82 : vector<8xf32> to vector<8x1xf32>
    %84 = vector.broadcast %83 : vector<8x1xf32> to vector<8x8xf32>
    %85 = arith.divf %81, %84 : vector<8x8xf32>
    %cst_33 = arith.constant dense<0.000000e+00> : vector<8x16xf32>
    %86 = tpu.matmul %85, %73, %cst_33 {dimension_numbers = #tpu.dot_dimension_numbers<[1], [0], [0], [1], [0, 0, 1, 1], [], []>} : vector<8x8xf32>, vector<8x16xf32>, vector<8x16xf32> -> vector<8x16xf32>
    %87 = tpu.concatenate %32, %50, %68, %86 in 1 : vector<8x16xf32>, vector<8x16xf32>, vector<8x16xf32>, vector<8x16xf32> -> vector<8x64xf32>
    %c0_34 = arith.constant 0 : index
    %c0_35 = arith.constant 0 : index
    %88 = vector.load %arg6[%c0_34, %c0_35] : memref<64x64xf32, #tpu.memory_space<vmem>>, vector<64x64xf32>
    %cst_36 = arith.constant dense<0.000000e+00> : vector<8x64xf32>
    %89 = tpu.matmul %87, %88, %cst_36 {dimension_numbers = #tpu.dot_dimension_numbers<[1], [0], [0], [1], [0, 0, 1, 1], [], []>} : vector<8x64xf32>, vector<64x64xf32>, vector<8x64xf32> -> vector<8x64xf32>
    %c0_37 = arith.constant 0 : index
    %c0_38 = arith.constant 0 : index
    %90 = vector.load %arg7[%c0_37, %c0_38] : memref<1x64xf32, #tpu.memory_space<vmem>>, vector<1x64xf32>
    %91 = vector.broadcast %90 : vector<1x64xf32> to vector<8x64xf32>
    %92 = arith.addf %89, %91 : vector<8x64xf32>
    %93 = vector.broadcast %5 : vector<8x1xf32> to vector<8x64xf32>
    %94 = arith.mulf %92, %93 : vector<8x64xf32>
    %c0_39 = arith.constant 0 : index
    %c0_40 = arith.constant 0 : index
    %c0_41 = arith.constant 0 : index
    %95 = vector.load %arg8[%c0_39, %c0_40, %c0_41] : memref<1x8x64xf32, #tpu.memory_space<vmem>>, vector<1x8x64xf32>
    %96 = vector.shape_cast %95 : vector<1x8x64xf32> to vector<8x64xf32>
    %97 = vector.shape_cast %94 : vector<8x64xf32> to vector<1x8x64xf32>
    tpu.vector_store %arg8[%c0_39, %c0_40, %c0_41], %97 {strides = array<i32>} : memref<1x8x64xf32, #tpu.memory_space<vmem>>, vector<1x8x64xf32>,
    return
  }
  func.func @transform_0(%arg0: i32) -> (i32, i32, i32) {
    %c0_i32 = arith.constant 0 : i32
    %c0_i32_0 = arith.constant 0 : i32
    %c0_i32_1 = arith.constant 0 : i32
    return %arg0, %c0_i32, %c0_i32_0 : i32, i32, i32
  }
  func.func @transform_1(%arg0: i32) -> (i32, i32, i32) {
    %c0_i32 = arith.constant 0 : i32
    %c0_i32_0 = arith.constant 0 : i32
    %c0_i32_1 = arith.constant 0 : i32
    return %arg0, %c0_i32, %c0_i32_0 : i32, i32, i32
  }
  func.func @transform_2(%arg0: i32) -> (i32, i32, i32) {
    %c0_i32 = arith.constant 0 : i32
    %c0_i32_0 = arith.constant 0 : i32
    %c0_i32_1 = arith.constant 0 : i32
    return %arg0, %c0_i32, %c0_i32_0 : i32, i32, i32
  }
  func.func @transform_3(%arg0: i32) -> (i32, i32) {
    %c0_i32 = arith.constant 0 : i32
    %c0_i32_0 = arith.constant 0 : i32
    %c0_i32_1 = arith.constant 0 : i32
    return %c0_i32, %c0_i32_0 : i32, i32
  }
  func.func @transform_4(%arg0: i32) -> (i32, i32) {
    %c0_i32 = arith.constant 0 : i32
    %c0_i32_0 = arith.constant 0 : i32
    %c0_i32_1 = arith.constant 0 : i32
    return %c0_i32, %c0_i32_0 : i32, i32
  }
  func.func @transform_5(%arg0: i32) -> (i32, i32) {
    %c0_i32 = arith.constant 0 : i32
    %c0_i32_0 = arith.constant 0 : i32
    %c0_i32_1 = arith.constant 0 : i32
    return %c0_i32, %c0_i32_0 : i32, i32
  }
  func.func @transform_6(%arg0: i32) -> (i32, i32) {
    %c0_i32 = arith.constant 0 : i32
    %c0_i32_0 = arith.constant 0 : i32
    %c0_i32_1 = arith.constant 0 : i32
    return %c0_i32, %c0_i32_0 : i32, i32
  }
  func.func @transform_7(%arg0: i32) -> (i32, i32, i32) {
    %c0_i32 = arith.constant 0 : i32
    %c0_i32_0 = arith.constant 0 : i32
    %c0_i32_1 = arith.constant 0 : i32
    return %arg0, %c0_i32, %c0_i32_0 : i32, i32, i32
  }
}

</mosaic_0001>

<llo_original>
// kernel: tpu_custom_call.1
$region0: #{tpu_custom_call.1}
  #allocation0 [shape = 'u32[]', space=smem, size = 0x4, offset = 0x4, fixed_abs, tag = 'smem constant byte address 0x4 - core index']
  #allocation1 [shape = 'u32[72,128]{1,0:T(1,128)}', space=vmem, size = 0x9000, scoped, tag = 'internal scratch']
  %s0 = inlined_call_operand.vmem [shape: f32[2,8,64], index: 0, kind: input, shape index: {}]
  %s1 = inlined_call_operand.vmem [shape: f32[2,1,8], index: 1, kind: input, shape index: {}]
  %s2 = inlined_call_operand.vmem [shape: f32[2,8,1], index: 2, kind: input, shape index: {}]
  %s3 = inlined_call_operand.hbm [shape: f32[64,192], index: 3, kind: input, shape index: {}]
  %s4 = inlined_call_operand.vmem [shape: f32[1,192], index: 4, kind: input, shape index: {}]
  %s5 = inlined_call_operand.hbm [shape: f32[64,64], index: 5, kind: input, shape index: {}]
  %s6 = inlined_call_operand.vmem [shape: f32[1,64], index: 6, kind: input, shape index: {}]
  %s7 = inlined_call_operand.hbm [shape: f32[2,8,64], index: 7, kind: output, shape index: {}]
  %s8 = sld [smem:[#allocation0]]
  $region69: #{tpu_custom_call.1} parent=0
    _
  %s10 = ssub.s32 1, %s8
  %s11 = scalar_select 0, %s10, %s8
  $region1: #{tpu_custom_call.1} parent=0
    #allocation2 [shape = 'u8[65536]{0}', space=vmem, size = 0x10000, scoped, tag = 'input window, operand 3, single buffered']
    #allocation3 [shape = 's32[2]{0}', space=sflag, size = 0x8, scoped, tag = 'scoped memory for tpu_custom_call.1']
    #allocation4 [shape = 's32[2]{0}', space=sflag, size = 0x8, scoped, tag = 'scoped memory for tpu_custom_call.1']
    #allocation5 [shape = 'u8[32768]{0}', space=vmem, size = 0x8000, scoped, tag = 'input window, operand 5, single buffered']
    #allocation6 [shape = 's32[1]{0}', space=sflag, size = 0x4, scoped, tag = 'scoped memory for tpu_custom_call.1']
    #allocation7 [shape = 'u8[8192]{0}', space=vmem, size = 0x2000, scoped, tag = 'output window, operand 0']
    %12 = vsyncpa [#allocation3], 0
    %13 = vsyncpa [#allocation6], 0
    %14 = vsyncpa [#allocation4], 0
    %s15 = scalar_lea.sflag [#allocation4], 1
    %16 = vsyncpa %s15, 0
    loop: start=0, step=1, limit=4
    $region2: #{tpu_custom_call.1} parent=1 // loop_pre_header
      _
    $region3: #{tpu_custom_call.1} parent=1 // loop_header
      %s18 = sphi 0, %s22
      %p19 = scmp.ge.s32.totalorder %s18, 4
      %s28 = sphi 0, %s30
      %s31 = sphi 0, %s28
      %s32 = sphi 0, %s31
      %s48 = sphi 0, %s32
      %s54 = sphi 0, %s56
      %s57 = sphi 0, %s54
      %s58 = sphi 0, %s57
      %s74 = sphi 0, %s58
      %s80 = sphi 0, %s82
      %s83 = sphi 0, %s80
      %s84 = sphi 0, %s83
      %s100 = sphi 0, %s84
      %s104 = sphi 0, %s104
      %s106 = sphi 0, %s104
      %s107 = sphi 0, %s106
      %s121 = sphi 0, %s107
      %s125 = sphi 0, %s125
      %s127 = sphi 0, %s125
      %s128 = sphi 0, %s127
      %s142 = sphi 0, %s128
      %s146 = sphi 0, %s146
      %s148 = sphi 0, %s146
      %s149 = sphi 0, %s148
      %s163 = sphi 0, %s149
      %s167 = sphi 0, %s167
      %s169 = sphi 0, %s167
      %s170 = sphi 0, %s169
      %s184 = sphi 0, %s170
      %s190 = sphi 0, %s192
      %s193 = sphi 0, %s190
      %s194 = sphi 0, %s193
      %s210 = sphi 0, %s194
    $region4: #{tpu_custom_call.1} parent=1 // loop_header_branch
      %21 = sbr.rel (%p19) target = $region8
    $region5: #{tpu_custom_call.1} parent=1 // loop_body
      %s23 = ssub.s32 %s18, 1
      %s24 = ssub.s32 %s18, 2
      %s25 = sadd.s32 %s18, 1
      %s26 = ssub.s32 %s18, %s25
      %p27 = scmp.eq.s32.totalorder %s26, 0
      %s29 = sadd.s32 %s28, 1
      %s30 = scalar_select %p27, %s28, %s29
      %p33 = pneg %p27
      %p34 = scmp.eq.s32.totalorder %s18, 1
      %p35 = por %p33, %p34
      %p36 = scmp.ne.s32.totalorder %s28, %s31
      %p37 = scmp.eq.s32.totalorder %s18, 0
      %p38 = por %p36, %p37
      %p39 = scmp.ne.s32.totalorder %s28, %s31
      %p40 = scmp.eq.s32.totalorder %s23, 1
      %p41 = por %p39, %p40
      %p42 = scmp.ne.s32.totalorder %s31, %s32
      %p43 = scmp.eq.s32.totalorder %s23, 0
      %p44 = por %p42, %p43
      %p45 = scmp.ne.s32.totalorder %s31, %s32
      %p46 = scmp.eq.s32.totalorder %s24, 1
      %p47 = por %p45, %p46
      %p49 = scmp.ne.s32.totalorder %s32, %s48
      %p50 = scmp.eq.s32.totalorder %s24, 0
      %p51 = por %p49, %p50
      %s52 = ssub.s32 %s18, %s25
      %p53 = scmp.eq.s32.totalorder %s52, 0
      %s55 = sadd.s32 %s54, 1
      %s56 = scalar_select %p53, %s54, %s55
      %p59 = pneg %p53
      %p60 = scmp.eq.s32.totalorder %s18, 1
      %p61 = por %p59, %p60
      %p62 = scmp.ne.s32.totalorder %s54, %s57
      %p63 = scmp.eq.s32.totalorder %s18, 0
      %p64 = por %p62, %p63
      %p65 = scmp.ne.s32.totalorder %s54, %s57
      %p66 = scmp.eq.s32.totalorder %s23, 1
      %p67 = por %p65, %p66
      %p68 = scmp.ne.s32.totalorder %s57, %s58
      %p69 = scmp.eq.s32.totalorder %s23, 0
      %p70 = por %p68, %p69
      %p71 = scmp.ne.s32.totalorder %s57, %s58
      %p72 = scmp.eq.s32.totalorder %s24, 1
      %p73 = por %p71, %p72
      %p75 = scmp.ne.s32.totalorder %s58, %s74
      %p76 = scmp.eq.s32.totalorder %s24, 0
      %p77 = por %p75, %p76
      %s78 = ssub.s32 %s18, %s25
      %p79 = scmp.eq.s32.totalorder %s78, 0
      %s81 = sadd.s32 %s80, 1
      %s82 = scalar_select %p79, %s80, %s81
      %p85 = pneg %p79
      %p86 = scmp.eq.s32.totalorder %s18, 1
      %p87 = por %p85, %p86
      %p88 = scmp.ne.s32.totalorder %s80, %s83
      %p89 = scmp.eq.s32.totalorder %s18, 0
      %p90 = por %p88, %p89
      %p91 = scmp.ne.s32.totalorder %s80, %s83
      %p92 = scmp.eq.s32.totalorder %s23, 1
      %p93 = por %p91, %p92
      %p94 = scmp.ne.s32.totalorder %s83, %s84
      %p95 = scmp.eq.s32.totalorder %s23, 0
      %p96 = por %p94, %p95
      %p97 = scmp.ne.s32.totalorder %s83, %s84
      %p98 = scmp.eq.s32.totalorder %s24, 1
      %p99 = por %p97, %p98
      %p101 = scmp.ne.s32.totalorder %s84, %s100
      %p102 = scmp.eq.s32.totalorder %s24, 0
      %p103 = por %p101, %p102
      %s105 = sadd.s32 %s104, 1
      %p108 = scmp.eq.s32.totalorder %s18, 1
      %p109 = scmp.ne.s32.totalorder %s104, %s106
      %p110 = scmp.eq.s32.totalorder %s18, 0
      %p111 = por %p109, %p110
      %p112 = scmp.ne.s32.totalorder %s104, %s106
      %p113 = scmp.eq.s32.totalorder %s23, 1
      %p114 = por %p112, %p113
      %p115 = scmp.ne.s32.totalorder %s106, %s107
      %p116 = scmp.eq.s32.totalorder %s23, 0
      %p117 = por %p115, %p116
      %p118 = scmp.ne.s32.totalorder %s106, %s107
      %p119 = scmp.eq.s32.totalorder %s24, 1
      %p120 = por %p118, %p119
      %p122 = scmp.ne.s32.totalorder %s107, %s121
      %p123 = scmp.eq.s32.totalorder %s24, 0
      %p124 = por %p122, %p123
      %s126 = sadd.s32 %s125, 1
      %p129 = scmp.eq.s32.totalorder %s18, 1
      %p130 = scmp.ne.s32.totalorder %s125, %s127
      %p131 = scmp.eq.s32.totalorder %s18, 0
      %p132 = por %p130, %p131
      %p133 = scmp.ne.s32.totalorder %s125, %s127
      %p134 = scmp.eq.s32.totalorder %s23, 1
      %p135 = por %p133, %p134
      %p136 = scmp.ne.s32.totalorder %s127, %s128
      %p137 = scmp.eq.s32.totalorder %s23, 0
      %p138 = por %p136, %p137
      %p139 = scmp.ne.s32.totalorder %s127, %s128
      %p140 = scmp.eq.s32.totalorder %s24, 1
      %p141 = por %p139, %p140
      %p143 = scmp.ne.s32.totalorder %s128, %s142
      %p144 = scmp.eq.s32.totalorder %s24, 0
      %p145 = por %p143, %p144
      %s147 = sadd.s32 %s146, 1
      %p150 = scmp.eq.s32.totalorder %s18, 1
      %p151 = scmp.ne.s32.totalorder %s146, %s148
      %p152 = scmp.eq.s32.totalorder %s18, 0
      %p153 = por %p151, %p152
      %p154 = scmp.ne.s32.totalorder %s146, %s148
      %p155 = scmp.eq.s32.totalorder %s23, 1
      %p156 = por %p154, %p155
      %p157 = scmp.ne.s32.totalorder %s148, %s149
      %p158 = scmp.eq.s32.totalorder %s23, 0
      %p159 = por %p157, %p158
      %p160 = scmp.ne.s32.totalorder %s148, %s149
      %p161 = scmp.eq.s32.totalorder %s24, 1
      %p162 = por %p160, %p161
      %p164 = scmp.ne.s32.totalorder %s149, %s163
      %p165 = scmp.eq.s32.totalorder %s24, 0
      %p166 = por %p164, %p165
      %s168 = sadd.s32 %s167, 1
      %p171 = scmp.eq.s32.totalorder %s18, 1
      %p172 = scmp.ne.s32.totalorder %s167, %s169
      %p173 = scmp.eq.s32.totalorder %s18, 0
      %p174 = por %p172, %p173
      %p175 = scmp.ne.s32.totalorder %s167, %s169
      %p176 = scmp.eq.s32.totalorder %s23, 1
      %p177 = por %p175, %p176
      %p178 = scmp.ne.s32.totalorder %s169, %s170
      %p179 = scmp.eq.s32.totalorder %s23, 0
      %p180 = por %p178, %p179
      %p181 = scmp.ne.s32.totalorder %s169, %s170
      %p182 = scmp.eq.s32.totalorder %s24, 1
      %p183 = por %p181, %p182
      %p185 = scmp.ne.s32.totalorder %s170, %s184
      %p186 = scmp.eq.s32.totalorder %s24, 0
      %p187 = por %p185, %p186
      %s188 = ssub.s32 %s18, %s25
      %p189 = scmp.eq.s32.totalorder %s188, 0
      %s191 = sadd.s32 %s190, 1
      %s192 = scalar_select %p189, %s190, %s191
      %p195 = pneg %p189
      %p196 = scmp.eq.s32.totalorder %s18, 1
      %p197 = por %p195, %p196
      %p198 = scmp.ne.s32.totalorder %s190, %s193
      %p199 = scmp.eq.s32.totalorder %s18, 0
      %p200 = por %p198, %p199
      %p201 = scmp.ne.s32.totalorder %s190, %s193
      %p202 = scmp.eq.s32.totalorder %s23, 1
      %p203 = por %p201, %p202
      %p204 = scmp.ne.s32.totalorder %s193, %s194
      %p205 = scmp.eq.s32.totalorder %s23, 0
      %p206 = por %p204, %p205
      %p207 = scmp.ne.s32.totalorder %s193, %s194
      %p208 = scmp.eq.s32.totalorder %s24, 1
      %p209 = por %p207, %p208
      %p211 = scmp.ne.s32.totalorder %s194, %s210
      %p212 = scmp.eq.s32.totalorder %s24, 0
      %p213 = por %p211, %p212
      %p214 = scmp.le.s32.totalorder 1, %s18
      %p215 = scmp.lt.s32.totalorder %s18, 3
      %p216 = pnand %p214, %p215
      %p217 = pneg %p216
      // Predicated region
      $region9: #{tpu_custom_call.1} parent=5 // pred_check
        _
      $region10: #{tpu_custom_call.1} parent=5 // pred_check_branch
        %219 = sbr.rel (%p216) target = $region12
      $region11: #{tpu_custom_call.1} parent=5 // pred_region
        %s220 = ssub.s32 %s18, 1
        // Predicated region
        $region13: #{tpu_custom_call.1} parent=11 // pred_check
          %p221 = pneg %p117
        $region14: #{tpu_custom_call.1} parent=11 // pred_check_branch
          %223 = sbr.rel (%p221) target = $region16
        $region15: #{tpu_custom_call.1} parent=11 // pred_region
          %225 = vsyncadd [#allocation3], 0
          %s226 = sshll.u32 %s3, 4
          %s227 = int_to_ptr.hbm [resolvable:$true] %s226
          %s228 = sshll.u32 [#allocation2], 4
          %s229 = int_to_ptr.vmem [resolvable:$true] %s228
          %234 = dma.hbm_to_vmem [thread:$0]  %s227, 2048, %s229, [#allocation3], 256, 256, 16
        $region16: #{tpu_custom_call.1} parent=11 // pred_fallthru
          _
        // Predicated region
        $region17: #{tpu_custom_call.1} parent=11 // pred_check
          %p235 = pneg %p138
        $region18: #{tpu_custom_call.1} parent=11 // pred_check_branch
          %237 = sbr.rel (%p235) target = $region20
        $region19: #{tpu_custom_call.1} parent=11 // pred_region
          _
        $region20: #{tpu_custom_call.1} parent=11 // pred_fallthru
          _
        // Predicated region
        $region21: #{tpu_custom_call.1} parent=11 // pred_check
          %p238 = pneg %p159
        $region22: #{tpu_custom_call.1} parent=11 // pred_check_branch
          %240 = sbr.rel (%p238) target = $region24
        $region23: #{tpu_custom_call.1} parent=11 // pred_region
          %242 = vsyncadd [#allocation6], 0
          %s243 = sshll.u32 %s5, 4
          %s244 = int_to_ptr.hbm [resolvable:$true] %s243
          %s245 = sshll.u32 [#allocation5], 4
          %s246 = int_to_ptr.vmem [resolvable:$true] %s245
          %251 = dma.hbm_to_vmem [thread:$0]  %s244, 1024, %s246, [#allocation6], 128, 128, 8
        $region24: #{tpu_custom_call.1} parent=11 // pred_fallthru
          _
        // Predicated region
        $region25: #{tpu_custom_call.1} parent=11 // pred_check
          %p252 = pneg %p180
        $region26: #{tpu_custom_call.1} parent=11 // pred_check_branch
          %254 = sbr.rel (%p252) target = $region28
        $region27: #{tpu_custom_call.1} parent=11 // pred_region
          _
        $region28: #{tpu_custom_call.1} parent=11 // pred_fallthru
          _
      $region12: #{tpu_custom_call.1} parent=5 // pred_fallthru
        _
      %p255 = scmp.lt.s32.totalorder %s18, 2
      // Predicated region
      $region29: #{tpu_custom_call.1} parent=5 // pred_check
        %p256 = pneg %p255
      $region30: #{tpu_custom_call.1} parent=5 // pred_check_branch
        %258 = sbr.rel (%p256) target = $region32
      $region31: #{tpu_custom_call.1} parent=5 // pred_region
        // Predicated region
        $region33: #{tpu_custom_call.1} parent=31 // pred_check
          %p259 = pneg %p38
        $region34: #{tpu_custom_call.1} parent=31 // pred_check_branch
          %261 = sbr.rel (%p259) target = $region36
        $region35: #{tpu_custom_call.1} parent=31 // pred_region
          %p262 = scmp.lt.s32.totalorder %s18, 1
          %s263 = scalar_select %p262, %s18, 1
          %s264 = smul.addr %s263, 8
          %s265 = scalar_lea.vmem %s0, %s264
        $region36: #{tpu_custom_call.1} parent=31 // pred_fallthru
          _
        // Predicated region
        $region37: #{tpu_custom_call.1} parent=31 // pred_check
          %p266 = pneg %p64
        $region38: #{tpu_custom_call.1} parent=31 // pred_check_branch
          %268 = sbr.rel (%p266) target = $region40
        $region39: #{tpu_custom_call.1} parent=31 // pred_region
          %p269 = scmp.lt.s32.totalorder %s18, 1
          %s270 = scalar_select %p269, %s18, 1
          %s271 = scalar_lea.vmem %s1, %s270
        $region40: #{tpu_custom_call.1} parent=31 // pred_fallthru
          _
        // Predicated region
        $region41: #{tpu_custom_call.1} parent=31 // pred_check
          %p272 = pneg %p90
        $region42: #{tpu_custom_call.1} parent=31 // pred_check_branch
          %274 = sbr.rel (%p272) target = $region44
        $region43: #{tpu_custom_call.1} parent=31 // pred_region
          %p275 = scmp.lt.s32.totalorder %s18, 1
          %s276 = scalar_select %p275, %s18, 1
          %s277 = smul.addr %s276, 8
          %s278 = scalar_lea.vmem %s2, %s277
        $region44: #{tpu_custom_call.1} parent=31 // pred_fallthru
          _
      $region32: #{tpu_custom_call.1} parent=5 // pred_fallthru
        _
      %p279 = scmp.le.s32.totalorder 1, %s18
      %p280 = scmp.lt.s32.totalorder %s18, 3
      %p281 = pnand %p279, %p280
      %p282 = pneg %p281
      // Predicated region
      $region45: #{tpu_custom_call.1} parent=5 // pred_check
        _
      $region46: #{tpu_custom_call.1} parent=5 // pred_check_branch
        %284 = sbr.rel (%p281) target = $region48
      $region47: #{tpu_custom_call.1} parent=5 // pred_region
        %s285 = ssub.s32 %s18, 1
        // Predicated region
        $region49: #{tpu_custom_call.1} parent=47 // pred_check
          %p286 = pneg %p117
        $region50: #{tpu_custom_call.1} parent=47 // pred_check_branch
          %288 = sbr.rel (%p286) target = $region52
        $region51: #{tpu_custom_call.1} parent=47 // pred_region
          %290 = dma.done [#allocation3], 2048
        $region52: #{tpu_custom_call.1} parent=47 // pred_fallthru
          _
        // Predicated region
        $region53: #{tpu_custom_call.1} parent=47 // pred_check
          %p291 = pneg %p159
        $region54: #{tpu_custom_call.1} parent=47 // pred_check_branch
          %293 = sbr.rel (%p291) target = $region56
        $region55: #{tpu_custom_call.1} parent=47 // pred_region
          %295 = dma.done [#allocation6], 1024
        $region56: #{tpu_custom_call.1} parent=47 // pred_fallthru
          _
        %p296 = scmp.lt.s32.totalorder %s23, 1
        %s297 = scalar_select %p296, %s23, 1
        %s298 = smul.addr %s297, 8
        %s299 = scalar_lea.vmem %s0, %s298
        %p300 = pneg %p44
        %p301 = pneg %p41
        %p302 = scmp.lt.s32.totalorder %s23, 1
        %s303 = scalar_select %p302, %s23, 1
        %s304 = scalar_lea.vmem %s1, %s303
        %p305 = pneg %p70
        %p306 = pneg %p67
        %p307 = scmp.lt.s32.totalorder %s23, 1
        %s308 = scalar_select %p307, %s23, 1
        %s309 = smul.addr %s308, 8
        %s310 = scalar_lea.vmem %s2, %s309
        %p311 = pneg %p96
        %p312 = pneg %p93
        %p313 = pneg %p117
        %p314 = pneg %p114
        %p315 = pneg %p138
        %p316 = pneg %p135
        %p317 = pneg %p159
        %p318 = pneg %p156
        %p319 = pneg %p180
        %p320 = pneg %p177
        %p321 = pneg %p206
        %p322 = pneg %p203
        %s323 = sand.u32 %s193, 1
        %s324 = scalar_lea.sflag [#allocation4], %s323
        %s325 = sand.u32 %s193, 1
        %s326 = smul.addr %s325, 8
        %s327 = scalar_lea.vmem [#allocation7], %s326
        %p328 = scmp.lt.s32.totalorder %s23, 1
        %s329 = scalar_select %p328, %s23, 1
        %s330 = smul.addr %s329, 8
        %s331 = scalar_lea.vmem %s0, %s330
        %p332 = scmp.lt.s32.totalorder %s23, 1
        %s333 = scalar_select %p332, %s23, 1
        %s334 = scalar_lea.vmem %s1, %s333
        %p335 = scmp.lt.s32.totalorder %s23, 1
        %s336 = scalar_select %p335, %s23, 1
        %s337 = smul.addr %s336, 8
        %s338 = scalar_lea.vmem %s2, %s337
        %v339 = vld [vmem:[%s331] sm:$0xff]
        %v340 = vld [vmem:[%s334] sm:$0x1]
        %v341 = vld [vmem:[%s338] sm:$0xff]
        %v342 = vld [vmem:[#allocation2] sm:$0xff]
        %v343 = vld [vmem:[#allocation2 + $0x8] sm:$0xff]
        %v344 = vld [vmem:[#allocation2 + $0x10] sm:$0xff]
        %v345 = vld [vmem:[#allocation2 + $0x18] sm:$0xff]
        %v346 = vld [vmem:[#allocation2 + $0x20] sm:$0xff]
        %v347 = vld [vmem:[#allocation2 + $0x28] sm:$0xff]
        %v348 = vld [vmem:[#allocation2 + $0x30] sm:$0xff]
        %v349 = vld [vmem:[#allocation2 + $0x38] sm:$0xff]
        %v350 = vld [vmem:[#allocation2 + $0x40] sm:$0xff]
        %v351 = vld [vmem:[#allocation2 + $0x48] sm:$0xff]
        %v352 = vld [vmem:[#allocation2 + $0x50] sm:$0xff]
        %v353 = vld [vmem:[#allocation2 + $0x58] sm:$0xff]
        %v354 = vld [vmem:[#allocation2 + $0x60] sm:$0xff]
        %v355 = vld [vmem:[#allocation2 + $0x68] sm:$0xff]
        %v356 = vld [vmem:[#allocation2 + $0x70] sm:$0xff]
        %v357 = vld [vmem:[#allocation2 + $0x78] sm:$0xff]
        %v358 = vld [vmem:[%s4] sm:$0x3]
        %v360 = vperm.slane %v358, 0
        %v361 = vperm.slane %v358, 1
        %vm364 = vcmask 523264
        %v366 = vsel %vm364, %v339, 0
        %368 = vmatpush.msra.mxu0 0.0
        %369 = vmatpush.msra.mxu0 0.0
        %370 = vmatpush.msra.mxu0 0.0
        %371 = vmatpush.msra.mxu0 0.0
        %372 = vmatpush.msra.mxu0 0.0
        %373 = vmatpush.msra.mxu0 0.0
        %374 = vmatpush.msra.mxu0 0.0
        %375 = vmatpush.msra.mxu0 0.0
        %376 = vmatpush.msra.mxu0 %v356
        %377 = vmatpush.msra.mxu0 %v354
        %378 = vmatpush.msra.mxu0 %v352
        %379 = vmatpush.msra.mxu0 %v350
        %380 = vmatpush.msra.mxu0 %v348
        %381 = vmatpush.msra.mxu0 %v346
        %382 = vmatpush.msra.mxu0 %v344
        %383 = vmatpush.msra.mxu0 %v342
        %384 = vmatmul.f32.gmra.mxu0 %v366
        %v385 = vpop.f32.mrf.mxu0
        %v386 = vadd.f32 %v360, %v385
        %387 = vdwg.mxu0
        %388 = vmatpush.msra.mxu0 0.0
        %389 = vmatpush.msra.mxu0 0.0
        %390 = vmatpush.msra.mxu0 0.0
        %391 = vmatpush.msra.mxu0 0.0
        %392 = vmatpush.msra.mxu0 0.0
        %393 = vmatpush.msra.mxu0 0.0
        %394 = vmatpush.msra.mxu0 0.0
        %395 = vmatpush.msra.mxu0 0.0
        %396 = vmatpush.msra.mxu0 %v357
        %397 = vmatpush.msra.mxu0 %v355
        %398 = vmatpush.msra.mxu0 %v353
        %399 = vmatpush.msra.mxu0 %v351
        %400 = vmatpush.msra.mxu0 %v349
        %401 = vmatpush.msra.mxu0 %v347
        %402 = vmatpush.msra.mxu0 %v345
        %403 = vmatpush.msra.mxu0 %v343
        %404 = vmatmul.f32.gmra.mxu0 %v366
        %v405 = vpop.f32.mrf.mxu0
        %v406 = vadd.f32 %v361, %v405
        %407 = vdwg.mxu0
        %v408 = vsub.f32 1.0, %v340
        %v409 = vmul.f32 %v408, -1e+30
        %v410 = vmul.f32 %v386, 0.25
        %v412 = vperm.slane %v409, 0
        %415 = vrot.lane.b32.xlu0 %v386, 64
        %v416 = vpop.permute.xlu0 %415
        %vm417 = vcmask 130048
        %v419 = vsel %vm417, %v410, 0
        %v421 = vsel %vm417, %v416, 0
        %423 = vmatpush.xpose.msra.mxu0 0.0
        %424 = vmatpush.xpose.msra.mxu0 0.0
        %425 = vmatpush.xpose.msra.mxu0 0.0
        %426 = vmatpush.xpose.msra.mxu0 0.0
        %427 = vmatpush.xpose.msra.mxu0 0.0
        %428 = vmatpush.xpose.msra.mxu0 0.0
        %429 = vmatpush.xpose.msra.mxu0 0.0
        %430 = vmatpush.xpose.msra.mxu0 0.0
        %431 = vmatpush.xpose.msra.mxu0 0.0
        %432 = vmatpush.xpose.msra.mxu0 0.0
        %433 = vmatpush.xpose.msra.mxu0 0.0
        %434 = vmatpush.xpose.msra.mxu0 0.0
        %435 = vmatpush.xpose.msra.mxu0 0.0
        %436 = vmatpush.xpose.msra.mxu0 0.0
        %437 = vmatpush.xpose.msra.mxu0 0.0
        %438 = vmatpush.xpose.msra.mxu0 %v421
        %439 = vmatmul.f32.gmra.mxu0 %v419
        %v440 = vpop.f32.mrf.mxu0
        %v441 = vadd.f32 %v412, %v440
        %442 = vdwg.mxu0
        %vm443 = vcmask 64512
        %v444 = vsel %vm443, %v441, -inf
        %445 = vmax.xlane.f32.xlu0 %v444
        %v446 = vpop.xlane.xlu0 %445
        %v447 = vsub.f32 %v441, %v446
        %v448 = vmul.f32 %v447, 1.442695
        %v449 = vpow.pop %v448
        %v450 = vsel %vm443, %v449, 0.0
        %451 = vadd.xlane.f32.xlu0 %v450
        %v452 = vpop.xlane.xlu0 %451
        %v453 = vrcp.pop %v452
        %v454 = vmul.f32 %v452, %v453
        %v455 = vsub.f32 1.0, %v454
        %v456 = vmul.f32 %v453, %v455
        %v457 = vadd.f32 %v453, %v456
        %vm458 = vweird.f32 %v452
        %vm459 = vweird.f32 %v453
        %vm460 = vmor %vm458, %vm459
        %v461 = vsel %vm460, %v453, %v457
        %v462 = vand.u32 2147483647, %v452
        %vm463 = vcmp.eq.f32.partialorder %v462, 8.507059e+37
        %v464 = vand.u32 %v452, 2147483648
        %v465 = vor.u32 1.1754944e-38, %v464
        %v466 = vsel %vm463, %v465, %v461
        %v467 = vmul.f32 %v449, %v466
        %v469 = vsel %vm443, %v467, 0
        %471 = vmatpush.msra.mxu0 0.0
        %472 = vmatpush.msra.mxu0 0.0
        %473 = vmatpush.msra.mxu0 0.0
        %474 = vmatpush.msra.mxu0 0.0
        %475 = vmatpush.msra.mxu0 0.0
        %476 = vmatpush.msra.mxu0 0.0
        %477 = vmatpush.msra.mxu0 0.0
        %478 = vmatpush.msra.mxu0 0.0
        %479 = vmatpush.msra.mxu0 0.0
        %480 = vmatpush.msra.mxu0 0.0
        %481 = vmatpush.msra.mxu0 0.0
        %482 = vmatpush.msra.mxu0 0.0
        %483 = vmatpush.msra.mxu0 0.0
        %484 = vmatpush.msra.mxu0 0.0
        %485 = vmatpush.msra.mxu0 0.0
        %486 = vmatpush.msra.mxu0 %v406
        %487 = vmatmul.f32.gmra.mxu0 %v469
        %v488 = vpop.f32.mrf.mxu0
        %v489 = vadd.f32 0.0, %v488
        %490 = vdwg.mxu0
        %491 = vrot.lane.b32.xlu0 %v410, 112
        %v492 = vpop.permute.xlu0 %491
        %493 = vrot.lane.b32.xlu0 %v386, 48
        %v494 = vpop.permute.xlu0 %493
        %v495 = vsel %vm417, %v492, 0
        %v497 = vsel %vm417, %v494, 0
        %499 = vmatpush.xpose.msra.mxu0 0.0
        %500 = vmatpush.xpose.msra.mxu0 0.0
        %501 = vmatpush.xpose.msra.mxu0 0.0
        %502 = vmatpush.xpose.msra.mxu0 0.0
        %503 = vmatpush.xpose.msra.mxu0 0.0
        %504 = vmatpush.xpose.msra.mxu0 0.0
        %505 = vmatpush.xpose.msra.mxu0 0.0
        %506 = vmatpush.xpose.msra.mxu0 0.0
        %507 = vmatpush.xpose.msra.mxu0 0.0
        %508 = vmatpush.xpose.msra.mxu0 0.0
        %509 = vmatpush.xpose.msra.mxu0 0.0
        %510 = vmatpush.xpose.msra.mxu0 0.0
        %511 = vmatpush.xpose.msra.mxu0 0.0
        %512 = vmatpush.xpose.msra.mxu0 0.0
        %513 = vmatpush.xpose.msra.mxu0 0.0
        %514 = vmatpush.xpose.msra.mxu0 %v497
        %515 = vmatmul.f32.gmra.mxu0 %v495
        %v516 = vpop.f32.mrf.mxu0
        %v517 = vadd.f32 %v412, %v516
        %518 = vdwg.mxu0
        %v519 = vsel %vm443, %v517, -inf
        %520 = vmax.xlane.f32.xlu0 %v519
        %v521 = vpop.xlane.xlu0 %520
        %v522 = vsub.f32 %v517, %v521
        %v523 = vmul.f32 %v522, 1.442695
        %v524 = vpow.pop %v523
        %v525 = vsel %vm443, %v524, 0.0
        %526 = vadd.xlane.f32.xlu0 %v525
        %v527 = vpop.xlane.xlu0 %526
        %v528 = vrcp.pop %v527
        %v529 = vmul.f32 %v527, %v528
        %v530 = vsub.f32 1.0, %v529
        %v531 = vmul.f32 %v528, %v530
        %v532 = vadd.f32 %v528, %v531
        %vm533 = vweird.f32 %v527
        %vm534 = vweird.f32 %v528
        %vm535 = vmor %vm533, %vm534
        %v536 = vsel %vm535, %v528, %v532
        %v537 = vand.u32 2147483647, %v527
        %vm538 = vcmp.eq.f32.partialorder %v537, 8.507059e+37
        %v539 = vand.u32 %v527, 2147483648
        %v540 = vor.u32 1.1754944e-38, %v539
        %v541 = vsel %vm538, %v540, %v536
        %v542 = vmul.f32 %v524, %v541
        %544 = vrot.lane.b32.xlu0 %v406, 112
        %v545 = vpop.permute.xlu0 %544
        %v548 = vsel %vm443, %v542, 0
        %550 = vmatpush.msra.mxu0 0.0
        %551 = vmatpush.msra.mxu0 0.0
        %552 = vmatpush.msra.mxu0 0.0
        %553 = vmatpush.msra.mxu0 0.0
        %554 = vmatpush.msra.mxu0 0.0
        %555 = vmatpush.msra.mxu0 0.0
        %556 = vmatpush.msra.mxu0 0.0
        %557 = vmatpush.msra.mxu0 0.0
        %558 = vmatpush.msra.mxu0 0.0
        %559 = vmatpush.msra.mxu0 0.0
        %560 = vmatpush.msra.mxu0 0.0
        %561 = vmatpush.msra.mxu0 0.0
        %562 = vmatpush.msra.mxu0 0.0
        %563 = vmatpush.msra.mxu0 0.0
        %564 = vmatpush.msra.mxu0 0.0
        %565 = vmatpush.msra.mxu0 %v545
        %566 = vmatmul.f32.gmra.mxu0 %v548
        %v567 = vpop.f32.mrf.mxu0
        %v568 = vadd.f32 0.0, %v567
        %569 = vdwg.mxu0
        %570 = vrot.lane.b32.xlu0 %v410, 96
        %v571 = vpop.permute.xlu0 %570
        %572 = vrot.lane.b32.xlu0 %v386, 32
        %v573 = vpop.permute.xlu0 %572
        %v574 = vsel %vm417, %v571, 0
        %v576 = vsel %vm417, %v573, 0
        %578 = vmatpush.xpose.msra.mxu0 0.0
        %579 = vmatpush.xpose.msra.mxu0 0.0
        %580 = vmatpush.xpose.msra.mxu0 0.0
        %581 = vmatpush.xpose.msra.mxu0 0.0
        %582 = vmatpush.xpose.msra.mxu0 0.0
        %583 = vmatpush.xpose.msra.mxu0 0.0
        %584 = vmatpush.xpose.msra.mxu0 0.0
        %585 = vmatpush.xpose.msra.mxu0 0.0
        %586 = vmatpush.xpose.msra.mxu0 0.0
        %587 = vmatpush.xpose.msra.mxu0 0.0
        %588 = vmatpush.xpose.msra.mxu0 0.0
        %589 = vmatpush.xpose.msra.mxu0 0.0
        %590 = vmatpush.xpose.msra.mxu0 0.0
        %591 = vmatpush.xpose.msra.mxu0 0.0
        %592 = vmatpush.xpose.msra.mxu0 0.0
        %593 = vmatpush.xpose.msra.mxu0 %v576
        %594 = vmatmul.f32.gmra.mxu0 %v574
        %v595 = vpop.f32.mrf.mxu0
        %v596 = vadd.f32 %v412, %v595
        %597 = vdwg.mxu0
        %v598 = vsel %vm443, %v596, -inf
        %599 = vmax.xlane.f32.xlu0 %v598
        %v600 = vpop.xlane.xlu0 %599
        %v601 = vsub.f32 %v596, %v600
        %v602 = vmul.f32 %v601, 1.442695
        %v603 = vpow.pop %v602
        %v604 = vsel %vm443, %v603, 0.0
        %605 = vadd.xlane.f32.xlu0 %v604
        %v606 = vpop.xlane.xlu0 %605
        %v607 = vrcp.pop %v606
        %v608 = vmul.f32 %v606, %v607
        %v609 = vsub.f32 1.0, %v608
        %v610 = vmul.f32 %v607, %v609
        %v611 = vadd.f32 %v607, %v610
        %vm612 = vweird.f32 %v606
        %vm613 = vweird.f32 %v607
        %vm614 = vmor %vm612, %vm613
        %v615 = vsel %vm614, %v607, %v611
        %v616 = vand.u32 2147483647, %v606
        %vm617 = vcmp.eq.f32.partialorder %v616, 8.507059e+37
        %v618 = vand.u32 %v606, 2147483648
        %v619 = vor.u32 1.1754944e-38, %v618
        %v620 = vsel %vm617, %v619, %v615
        %v621 = vmul.f32 %v603, %v620
        %622 = vrot.lane.b32.xlu0 %v406, 96
        %v623 = vpop.permute.xlu0 %622
        %v626 = vsel %vm443, %v621, 0
        %628 = vmatpush.msra.mxu0 0.0
        %629 = vmatpush.msra.mxu0 0.0
        %630 = vmatpush.msra.mxu0 0.0
        %631 = vmatpush.msra.mxu0 0.0
        %632 = vmatpush.msra.mxu0 0.0
        %633 = vmatpush.msra.mxu0 0.0
        %634 = vmatpush.msra.mxu0 0.0
        %635 = vmatpush.msra.mxu0 0.0
        %636 = vmatpush.msra.mxu0 0.0
        %637 = vmatpush.msra.mxu0 0.0
        %638 = vmatpush.msra.mxu0 0.0
        %639 = vmatpush.msra.mxu0 0.0
        %640 = vmatpush.msra.mxu0 0.0
        %641 = vmatpush.msra.mxu0 0.0
        %642 = vmatpush.msra.mxu0 0.0
        %643 = vmatpush.msra.mxu0 %v623
        %644 = vmatmul.f32.gmra.mxu0 %v626
        %v645 = vpop.f32.mrf.mxu0
        %v646 = vadd.f32 0.0, %v645
        %647 = vdwg.mxu0
        %648 = vrot.lane.b32.xlu0 %v410, 80
        %v649 = vpop.permute.xlu0 %648
        %650 = vrot.lane.b32.xlu0 %v386, 16
        %v651 = vpop.permute.xlu0 %650
        %v652 = vsel %vm417, %v649, 0
        %v654 = vsel %vm417, %v651, 0
        %656 = vmatpush.xpose.msra.mxu0 0.0
        %657 = vmatpush.xpose.msra.mxu0 0.0
        %658 = vmatpush.xpose.msra.mxu0 0.0
        %659 = vmatpush.xpose.msra.mxu0 0.0
        %660 = vmatpush.xpose.msra.mxu0 0.0
        %661 = vmatpush.xpose.msra.mxu0 0.0
        %662 = vmatpush.xpose.msra.mxu0 0.0
        %663 = vmatpush.xpose.msra.mxu0 0.0
        %664 = vmatpush.xpose.msra.mxu0 0.0
        %665 = vmatpush.xpose.msra.mxu0 0.0
        %666 = vmatpush.xpose.msra.mxu0 0.0
        %667 = vmatpush.xpose.msra.mxu0 0.0
        %668 = vmatpush.xpose.msra.mxu0 0.0
        %669 = vmatpush.xpose.msra.mxu0 0.0
        %670 = vmatpush.xpose.msra.mxu0 0.0
        %671 = vmatpush.xpose.msra.mxu0 %v654
        %672 = vmatmul.f32.gmra.mxu0 %v652
        %v673 = vpop.f32.mrf.mxu0
        %v674 = vadd.f32 %v412, %v673
        %675 = vdwg.mxu0
        %v676 = vsel %vm443, %v674, -inf
        %677 = vmax.xlane.f32.xlu0 %v676
        %v678 = vpop.xlane.xlu0 %677
        %v679 = vsub.f32 %v674, %v678
        %v680 = vmul.f32 %v679, 1.442695
        %v681 = vpow.pop %v680
        %v682 = vsel %vm443, %v681, 0.0
        %683 = vadd.xlane.f32.xlu0 %v682
        %v684 = vpop.xlane.xlu0 %683
        %v685 = vrcp.pop %v684
        %v686 = vmul.f32 %v684, %v685
        %v687 = vsub.f32 1.0, %v686
        %v688 = vmul.f32 %v685, %v687
        %v689 = vadd.f32 %v685, %v688
        %vm690 = vweird.f32 %v684
        %vm691 = vweird.f32 %v685
        %vm692 = vmor %vm690, %vm691
        %v693 = vsel %vm692, %v685, %v689
        %v694 = vand.u32 2147483647, %v684
        %vm695 = vcmp.eq.f32.partialorder %v694, 8.507059e+37
        %v696 = vand.u32 %v684, 2147483648
        %v697 = vor.u32 1.1754944e-38, %v696
        %v698 = vsel %vm695, %v697, %v693
        %v699 = vmul.f32 %v681, %v698
        %700 = vrot.lane.b32.xlu0 %v406, 80
        %v701 = vpop.permute.xlu0 %700
        %v704 = vsel %vm443, %v699, 0
        %706 = vmatpush.msra.mxu0 0.0
        %707 = vmatpush.msra.mxu0 0.0
        %708 = vmatpush.msra.mxu0 0.0
        %709 = vmatpush.msra.mxu0 0.0
        %710 = vmatpush.msra.mxu0 0.0
        %711 = vmatpush.msra.mxu0 0.0
        %712 = vmatpush.msra.mxu0 0.0
        %713 = vmatpush.msra.mxu0 0.0
        %714 = vmatpush.msra.mxu0 0.0
        %715 = vmatpush.msra.mxu0 0.0
        %716 = vmatpush.msra.mxu0 0.0
        %717 = vmatpush.msra.mxu0 0.0
        %718 = vmatpush.msra.mxu0 0.0
        %719 = vmatpush.msra.mxu0 0.0
        %720 = vmatpush.msra.mxu0 0.0
        %721 = vmatpush.msra.mxu0 %v701
        %722 = vmatmul.f32.gmra.mxu0 %v704
        %v723 = vpop.f32.mrf.mxu0
        %v724 = vadd.f32 0.0, %v723
        %725 = vdwg.mxu0
        %727 = vrot.lane.b32.xlu0 %v568, 16
        %v728 = vpop.permute.xlu0 %727
        %731 = vrot.lane.b32.xlu0 %v646, 32
        %v732 = vpop.permute.xlu0 %731
        %735 = vrot.lane.b32.xlu0 %v724, 48
        %v736 = vpop.permute.xlu0 %735
        %v738 = vsel %vm417, %v489, %v728
        %vm739 = vcmask 261120
        %v740 = vsel %vm739, %v738, %v732
        %vm741 = vcmask 392192
        %v742 = vsel %vm741, %v740, %v736
        %v743 = vld [vmem:[#allocation5] sm:$0xff]
        %v744 = vld [vmem:[#allocation5 + $0x8] sm:$0xff]
        %v745 = vld [vmem:[#allocation5 + $0x10] sm:$0xff]
        %v746 = vld [vmem:[#allocation5 + $0x18] sm:$0xff]
        %v747 = vld [vmem:[#allocation5 + $0x20] sm:$0xff]
        %v748 = vld [vmem:[#allocation5 + $0x28] sm:$0xff]
        %v749 = vld [vmem:[#allocation5 + $0x30] sm:$0xff]
        %v750 = vld [vmem:[#allocation5 + $0x38] sm:$0xff]
        %v751 = vld [vmem:[%s6] sm:$0x1]
        %v753 = vperm.slane %v751, 0
        %v756 = vsel %vm364, %v742, 0
        %758 = vmatpush.msra.mxu0 0.0
        %759 = vmatpush.msra.mxu0 0.0
        %760 = vmatpush.msra.mxu0 0.0
        %761 = vmatpush.msra.mxu0 0.0
        %762 = vmatpush.msra.mxu0 0.0
        %763 = vmatpush.msra.mxu0 0.0
        %764 = vmatpush.msra.mxu0 0.0
        %765 = vmatpush.msra.mxu0 0.0
        %766 = vmatpush.msra.mxu0 %v750
        %767 = vmatpush.msra.mxu0 %v749
        %768 = vmatpush.msra.mxu0 %v748
        %769 = vmatpush.msra.mxu0 %v747
        %770 = vmatpush.msra.mxu0 %v746
        %771 = vmatpush.msra.mxu0 %v745
        %772 = vmatpush.msra.mxu0 %v744
        %773 = vmatpush.msra.mxu0 %v743
        %774 = vmatmul.f32.gmra.mxu0 %v756
        %v775 = vpop.f32.mrf.mxu0
        %v776 = vadd.f32 %v753, %v775
        %777 = vdwg.mxu0
        %779 = vset.pattern.permute.xlu0 0
        %780 = vperm.xlu0 %779, %v341
        %v781 = vpop.permute.xlu0 %780
        %v783 = vmul.f32 %v776, %v781
        %784 = vst.msk [vmem:[%s327] sm:$0xff] %vm364, %v783
        %s785 = sand.u32 %s193, 1
        %s786 = scalar_lea.sflag [#allocation4], %s785
        %s787 = sand.u32 %s193, 1
        %s788 = smul.addr %s787, 8
        %s789 = scalar_lea.vmem [#allocation7], %s788
        // Predicated region
        $region57: #{tpu_custom_call.1} parent=47 // pred_check
          %p790 = pneg %p203
        $region58: #{tpu_custom_call.1} parent=47 // pred_check_branch
          %792 = sbr.rel (%p790) target = $region60
        $region59: #{tpu_custom_call.1} parent=47 // pred_region
          %794 = vsyncadd %s786, 0
          %s795 = smul.addr %s23, 8
          %s796 = scalar_lea.hbm %s7, %s795
          %s798 = sshll.u32 %s789, 4
          %s799 = int_to_ptr.vmem [resolvable:$true] %s798
          %s800 = sshll.u32 %s796, 4
          %s801 = int_to_ptr.hbm [resolvable:$true] %s800
          %803 = dma.vmem_to_hbm [thread:$0]  %s799, 128, %s801, %s786
        $region60: #{tpu_custom_call.1} parent=47 // pred_fallthru
          _
      $region48: #{tpu_custom_call.1} parent=5 // pred_fallthru
        _
      %p804 = scmp.le.s32.totalorder 2, %s18
      // Predicated region
      $region61: #{tpu_custom_call.1} parent=5 // pred_check
        %p805 = pneg %p804
      $region62: #{tpu_custom_call.1} parent=5 // pred_check_branch
        %807 = sbr.rel (%p805) target = $region64
      $region63: #{tpu_custom_call.1} parent=5 // pred_region
        %s808 = ssub.s32 %s18, 2
        // Predicated region
        $region65: #{tpu_custom_call.1} parent=63 // pred_check
          %p809 = pneg %p209
        $region66: #{tpu_custom_call.1} parent=63 // pred_check_branch
          %811 = sbr.rel (%p809) target = $region68
        $region67: #{tpu_custom_call.1} parent=63 // pred_region
          %s812 = sand.u32 %s194, 1
          %s813 = scalar_lea.sflag [#allocation4], %s812
          %s814 = sand.u32 %s194, 1
          %s815 = smul.addr %s814, 8
          %s816 = scalar_lea.vmem [#allocation7], %s815
          %818 = dma.done %s813, 128
        $region68: #{tpu_custom_call.1} parent=63 // pred_fallthru
          _
      $region64: #{tpu_custom_call.1} parent=5 // pred_fallthru
        _
    $region6: #{tpu_custom_call.1} parent=1 // loop_footer
      %s22 = sadd.s32 1, %s18
    $region7: #{tpu_custom_call.1} parent=1 // loop_footer_branch
      %17 = sbr.rel target = $region3
    $region8: #{tpu_custom_call.1} parent=1 // loop_exit
      _
    %819 = vsyncpa [#allocation3], 1
    %s820 = scalar_lea.sflag [#allocation3], 1
    %821 = vsyncpa %s820, 1
    %822 = vsyncpa [#allocation6], 1
    %823 = vsyncpa [#allocation4], 1
    %s824 = scalar_lea.sflag [#allocation4], 1
    %825 = vsyncpa %s824, 1

</llo_original>
